<compile_context>
chip_gen: v6e
topology: v6e:2x2x1
jax: 0.10.0
libtpu: 0.0.40
codegen_flags: <defaults>
</compile_context>

<pallas_src>
import jax
import jax.numpy as jnp
from jax import lax
from jax.experimental import pallas as pl
from jax.experimental.pallas import tpu as pltpu

# Module geometry (fixed by MaxPoolModule: Conv2d(3, 6, k=3, s=2) -> MaxPool2d(3, 2)).
C_IN, C_OUT = 3, 6
KH = KW = 3
CONV_STRIDE = 2
POOL_K, POOL_S = 3, 2

# Kernel-side padded geometry.
K = C_IN * KH * KW          # 27 reduction columns
K_PAD = 32                  # 27 -> 32 (zero columns are free on the MXU)
C_PAD = 128                 # lane-dense output channels (6 -> 128)
R = POOL_K * POOL_K         # 9 conv outputs inside the single pool window
R_PAD = 16                  # 9 -> 16 rows/window (duplicated real row), power of two
N_PAD = 8                   # batch padded to a full sublane tile


# --------------------------------------------------------------------------
# Pallas kernel: conv-as-matmul + aligned tree max-pool + bias epilogue
# --------------------------------------------------------------------------
def conv_maxpool_kernel(p_ref, w_ref, b_ref, out_ref):
    # p_ref:   (R_PAD*N_PAD, K_PAD) = (128, 32) im2col patches, row = r*N_PAD + b
    # w_ref:   (K_PAD, C_PAD) conv weights (zero-padded)
    # b_ref:   (N_PAD, C_PAD) per-channel bias, pre-broadcast over rows
    # out_ref: (N_PAD, C_PAD)
    acc = jnp.dot(p_ref[...], w_ref[...],
                  preferred_element_type=jnp.float32,
                  precision=lax.Precision.HIGHEST)            # (128, 128)
    # MaxPool2d(3, stride=2) over the single window: window rows are the
    # sublane-major axis, so the pool reduces as a tree of full-slab
    # elementwise maxes on 8-aligned half-slices (no relayouts, no concat).
    m = acc
    while m.shape[0] > N_PAD:
        half = m.shape[0] // 2
        m = jnp.maximum(m[:half, :], m[half:, :])             # 64 -> 32 -> 16 -> 8 rows
    # Per-channel bias commutes with the max; add it once on the pooled tile.
    out_ref[...] = m + b_ref[...]                              # full (8,128) unmasked vst


# --------------------------------------------------------------------------
# Wrapper: minimal patch prep (jitted, fuses), one-time weight prep, pallas_call
# --------------------------------------------------------------------------
def _build_patches(x):
    """(N, C_IN, H, W) -> (R_PAD*N_PAD, K_PAD) im2col rows for the single pool window.

    Row ordering is (window-row major, batch minor): row = r * N_PAD + b, so the
    in-kernel pooling reduces over aligned half-slabs of the matmul result.
    """
    N = x.shape[0]
    rows = []
    for oh in range(POOL_K):
        for ow in range(POOL_K):
            blk = x[:, :, CONV_STRIDE * oh:CONV_STRIDE * oh + KH,
                          CONV_STRIDE * ow:CONV_STRIDE * ow + KW]   # (N, C_IN, KH, KW)
            rows.append(blk.reshape(N, K))                          # (c, kh, kw) minor
    p = jnp.stack(rows, axis=0)                                     # (R, N, K)
    # Window rows 9 -> 16: duplicate a REAL row (edge mode). Zero rows would be
    # wrong: a zero conv value could exceed the true max when the whole window
    # is negative.
    p = jnp.pad(p, ((0, R_PAD - R), (0, 0), (0, 0)), mode="edge")
    # Batch -> 8 and K -> 32 with zeros (padded batches are sliced off; zero
    # K-columns hit zero weight rows).
    p = jnp.pad(p, ((0, 0), (0, N_PAD - N), (0, K_PAD - K)))
    return p.reshape(R_PAD * N_PAD, K_PAD)


def prepare_params(conv_w, conv_b):
    """One-time weight/bias prep, hoisted out of the per-call path."""
    w_mat = conv_w.reshape(C_OUT, K).T                              # (K, C_OUT)
    w_mat = jnp.pad(w_mat, ((0, K_PAD - K), (0, C_PAD - C_OUT)))    # (K_PAD, C_PAD)
    b_mat = jnp.pad(jnp.broadcast_to(conv_b[None, :], (N_PAD, C_OUT)),
                    ((0, 0), (0, C_PAD - C_OUT)))                   # (N_PAD, C_PAD)
    return w_mat, b_mat


@jax.jit
def maxpool_module_forward(x, w_mat, b_mat):
    """x: (N, 3, 10, 10) f32; w_mat/b_mat from prepare_params. Returns (N, 6, 1, 1)."""
    N, _, H, W = x.shape
    OH = (H - KH) // CONV_STRIDE + 1
    OW = (W - KW) // CONV_STRIDE + 1
    PH = (OH - POOL_K) // POOL_S + 1
    PW = (OW - POOL_K) // POOL_S + 1
    # This fused kernel implements the module's fixed geometry: one pool window.
    assert PH == 1 and PW == 1 and N <= N_PAD, (PH, PW, N)

    patches = _build_patches(x)                                     # (128, 32)

    cost = pl.CostEstimate(
        flops=2 * (R_PAD * N_PAD) * K_PAD * C_PAD,
        transcendentals=0,
        bytes_accessed=4 * (R_PAD * N_PAD * K_PAD + K_PAD * C_PAD + 2 * N_PAD * C_PAD),
    )

    pooled = pl.pallas_call(
        conv_maxpool_kernel,
        out_shape=jax.ShapeDtypeStruct((N_PAD, C_PAD), jnp.float32),
        in_specs=[pl.BlockSpec(memory_space=pltpu.MemorySpace.VMEM)] * 3,
        out_specs=pl.BlockSpec(memory_space=pltpu.MemorySpace.VMEM),
        cost_estimate=cost,
    )(patches, w_mat, b_mat)

    return pooled[:N, :C_OUT].reshape(N, C_OUT, 1, 1)


# --------------------------------------------------------------------------
# Reference (pure JAX) for sanity check
# --------------------------------------------------------------------------
def _reference(x, conv_w, conv_b):
    y = lax.conv_general_dilated(
        x, conv_w, window_strides=(CONV_STRIDE, CONV_STRIDE), padding="VALID",
        dimension_numbers=("NCHW", "OIHW", "NCHW"),
        precision=lax.Precision.HIGHEST)
    y = y + conv_b.reshape(1, -1, 1, 1)
    return lax.reduce_window(
        y, -jnp.inf, lax.max,
        window_dimensions=(1, 1, POOL_K, POOL_K),
        window_strides=(1, 1, POOL_S, POOL_S),
        padding="VALID")


if __name__ == "__main__":
    key = jax.random.PRNGKey(0)
    k_x, k_w, k_b = jax.random.split(key, 3)

    # Conv2d(3, 6, kernel_size=3): weight (6, 3, 3, 3), bias (6,)
    fan_in = C_IN * KH * KW
    bound = 1.0 / (fan_in ** 0.5)
    conv_w = jax.random.uniform(k_w, (C_OUT, C_IN, KH, KW), jnp.float32, -bound, bound)
    conv_b = jax.random.uniform(k_b, (C_OUT,), jnp.float32, -bound, bound)

    # Input matching MaxPoolModule.get_random_inputs(): (2, 3, 10, 10)
    x = jax.random.normal(k_x, (2, C_IN, 10, 10), jnp.float32)

    # Hoisted weight prep: run once, reused across forward calls.
    w_mat, b_mat = prepare_params(conv_w, conv_b)

    out = jax.block_until_ready(maxpool_module_forward(x, w_mat, b_mat))
    ref = jax.block_until_ready(_reference(x, conv_w, conv_b))

    assert out.shape == (2, C_OUT, 1, 1), out.shape
    assert jnp.allclose(out, ref, rtol=1e-4, atol=1e-4), "mismatch vs reference"

    print("KERNEL_OK")
</pallas_src>

<mosaic_0001>
module attributes {stable_mosaic.version = 11 : i64} {
  func.func @conv_maxpool_kernel(%arg0: memref<128x32xf32, #tpu.memory_space<vmem>>, %arg1: memref<32x128xf32, #tpu.memory_space<vmem>>, %arg2: memref<8x128xf32, #tpu.memory_space<vmem>>, %arg3: memref<8x128xf32, #tpu.memory_space<vmem>>) attributes {dimension_semantics = [], scalar_prefetch = 0 : i64, scratch_operands = 0 : i64, tpu.core_type = #tpu.core_type<tc>} {
    %c0 = arith.constant 0 : index
    %c0_0 = arith.constant 0 : index
    %0 = vector.load %arg0[%c0, %c0_0] : memref<128x32xf32, #tpu.memory_space<vmem>>, vector<128x32xf32>
    %c0_1 = arith.constant 0 : index
    %c0_2 = arith.constant 0 : index
    %1 = vector.load %arg1[%c0_1, %c0_2] : memref<32x128xf32, #tpu.memory_space<vmem>>, vector<32x128xf32>
    %cst = arith.constant dense<0.000000e+00> : vector<128x128xf32>
    %2 = tpu.matmul %0, %1, %cst {dimension_numbers = #tpu.dot_dimension_numbers<[1], [0], [0], [1], [0, 0, 1, 1], [], []>, precision = #tpu.contract_precision<fp32>} : vector<128x32xf32>, vector<32x128xf32>, vector<128x128xf32> -> vector<128x128xf32>
    %3 = vector.extract_strided_slice %2 {offsets = [0, 0], sizes = [64, 128], strides = [1, 1]} : vector<128x128xf32> to vector<64x128xf32>
    %4 = vector.extract_strided_slice %2 {offsets = [64, 0], sizes = [64, 128], strides = [1, 1]} : vector<128x128xf32> to vector<64x128xf32>
    %5 = arith.maximumf %3, %4 : vector<64x128xf32>
    %6 = vector.extract_strided_slice %5 {offsets = [0, 0], sizes = [32, 128], strides = [1, 1]} : vector<64x128xf32> to vector<32x128xf32>
    %7 = vector.extract_strided_slice %5 {offsets = [32, 0], sizes = [32, 128], strides = [1, 1]} : vector<64x128xf32> to vector<32x128xf32>
    %8 = arith.maximumf %6, %7 : vector<32x128xf32>
    %9 = vector.extract_strided_slice %8 {offsets = [0, 0], sizes = [16, 128], strides = [1, 1]} : vector<32x128xf32> to vector<16x128xf32>
    %10 = vector.extract_strided_slice %8 {offsets = [16, 0], sizes = [16, 128], strides = [1, 1]} : vector<32x128xf32> to vector<16x128xf32>
    %11 = arith.maximumf %9, %10 : vector<16x128xf32>
    %12 = vector.extract_strided_slice %11 {offsets = [0, 0], sizes = [8, 128], strides = [1, 1]} : vector<16x128xf32> to vector<8x128xf32>
    %13 = vector.extract_strided_slice %11 {offsets = [8, 0], sizes = [8, 128], strides = [1, 1]} : vector<16x128xf32> to vector<8x128xf32>
    %14 = arith.maximumf %12, %13 : vector<8x128xf32>
    %c0_3 = arith.constant 0 : index
    %c0_4 = arith.constant 0 : index
    %15 = vector.load %arg2[%c0_3, %c0_4] : memref<8x128xf32, #tpu.memory_space<vmem>>, vector<8x128xf32>
    %16 = arith.addf %14, %15 : vector<8x128xf32>
    %c0_5 = arith.constant 0 : index
    %c0_6 = arith.constant 0 : index
    %17 = vector.load %arg3[%c0_5, %c0_6] : memref<8x128xf32, #tpu.memory_space<vmem>>, vector<8x128xf32>
    tpu.vector_store %arg3[%c0_5, %c0_6], %16 {strides = array<i32>} : memref<8x128xf32, #tpu.memory_space<vmem>>, vector<8x128xf32>,
    return
  }
}

</mosaic_0001>

<llo_original>
// kernel: maxpool_module_forward.1
$region0: #{maxpool_module_forward.1}
  #allocation0 [shape = 'u32[]', space=smem, size = 0x4, offset = 0x4, fixed_abs, tag = 'smem constant byte address 0x4 - core index']
  #allocation1 [shape = 'u32[144,128]{1,0:T(1,128)}', space=vmem, size = 0x12000, scoped, tag = 'internal scratch']
  %s0 = inlined_call_operand.vmem [shape: f32[128,32], index: 0, kind: input, shape index: {}]
  %s1 = inlined_call_operand.vmem [shape: f32[32,128], index: 1, kind: input, shape index: {}]
  %s2 = inlined_call_operand.vmem [shape: f32[8,128], index: 2, kind: input, shape index: {}]
  %s3 = inlined_call_operand.vmem [shape: f32[8,128], index: 3, kind: output, shape index: {}]
  %s4 = sld [smem:[#allocation0]]
  $region22: #{maxpool_module_forward.1} parent=0
    _
  %s6 = ssub.s32 1, %s4
  %s7 = scalar_select 0, %s6, %s4
  // Predicated region
  $region2: #{maxpool_module_forward.1} parent=0 // pred_check
    _
  $region3: #{maxpool_module_forward.1} parent=0 // pred_check_branch
    %9 = sbr.rel (0) target = $region5
  $region4: #{maxpool_module_forward.1} parent=0 // pred_region
    _
  $region5: #{maxpool_module_forward.1} parent=0 // pred_fallthru
    _
  // Predicated region
  $region6: #{maxpool_module_forward.1} parent=0 // pred_check
    _
  $region7: #{maxpool_module_forward.1} parent=0 // pred_check_branch
    %11 = sbr.rel (0) target = $region9
  $region8: #{maxpool_module_forward.1} parent=0 // pred_region
    _
  $region9: #{maxpool_module_forward.1} parent=0 // pred_fallthru
    _
  // Predicated region
  $region10: #{maxpool_module_forward.1} parent=0 // pred_check
    _
  $region11: #{maxpool_module_forward.1} parent=0 // pred_check_branch
    %13 = sbr.rel (0) target = $region13
  $region12: #{maxpool_module_forward.1} parent=0 // pred_region
    _
  $region13: #{maxpool_module_forward.1} parent=0 // pred_fallthru
    _
  %v14 = vld [vmem:[%s0] sm:$0xff]
  %v15 = vld [vmem:[%s0 + $0x8] sm:$0xff]
  %v16 = vld [vmem:[%s0 + $0x10] sm:$0xff]
  %v17 = vld [vmem:[%s0 + $0x18] sm:$0xff]
  %v18 = vld [vmem:[%s0 + $0x20] sm:$0xff]
  %v19 = vld [vmem:[%s0 + $0x28] sm:$0xff]
  %v20 = vld [vmem:[%s0 + $0x30] sm:$0xff]
  %v21 = vld [vmem:[%s0 + $0x38] sm:$0xff]
  %v22 = vld [vmem:[%s0 + $0x40] sm:$0xff]
  %v23 = vld [vmem:[%s0 + $0x48] sm:$0xff]
  %v24 = vld [vmem:[%s0 + $0x50] sm:$0xff]
  %v25 = vld [vmem:[%s0 + $0x58] sm:$0xff]
  %v26 = vld [vmem:[%s0 + $0x60] sm:$0xff]
  %v27 = vld [vmem:[%s0 + $0x68] sm:$0xff]
  %v28 = vld [vmem:[%s0 + $0x70] sm:$0xff]
  %v29 = vld [vmem:[%s0 + $0x78] sm:$0xff]
  %v30 = vld [vmem:[%s1] sm:$0xff]
  %v31 = vld [vmem:[%s1 + $0x8] sm:$0xff]
  %v32 = vld [vmem:[%s1 + $0x10] sm:$0xff]
  %v33 = vld [vmem:[%s1 + $0x18] sm:$0xff]
  %vm34 = vcmask 261120
  %v36 = vsel %vm34, %v14, 0
  %v39 = vsel %vm34, %v15, 0
  %v42 = vsel %vm34, %v16, 0
  %v45 = vsel %vm34, %v17, 0
  %v48 = vsel %vm34, %v18, 0
  %v51 = vsel %vm34, %v19, 0
  %v54 = vsel %vm34, %v20, 0
  %v57 = vsel %vm34, %v21, 0
  %v60 = vsel %vm34, %v22, 0
  %v63 = vsel %vm34, %v23, 0
  %v66 = vsel %vm34, %v24, 0
  %v69 = vsel %vm34, %v25, 0
  %v72 = vsel %vm34, %v26, 0
  %v75 = vsel %vm34, %v27, 0
  %v78 = vsel %vm34, %v28, 0
  %v81 = vsel %vm34, %v29, 0
  %83 = vmatprep.subr.mxu0 0.0
  %84 = vmatpush1.msra.mxu0 0.0
  %85 = vmatprep.subr.mxu0 0.0
  %86 = vmatpush1.msra.mxu0 0.0
  %87 = vmatprep.subr.mxu0 0.0
  %88 = vmatpush1.msra.mxu0 0.0
  %89 = vmatprep.subr.mxu0 0.0
  %90 = vmatpush1.msra.mxu0 0.0
  %91 = vmatprep.subr.mxu0 0.0
  %92 = vmatpush1.msra.mxu0 0.0
  %93 = vmatprep.subr.mxu0 0.0
  %94 = vmatpush1.msra.mxu0 0.0
  %95 = vmatprep.subr.mxu0 0.0
  %96 = vmatpush1.msra.mxu0 0.0
  %97 = vmatprep.subr.mxu0 0.0
  %98 = vmatpush1.msra.mxu0 0.0
  %99 = vmatprep.subr.mxu0 0.0
  %100 = vmatpush1.msra.mxu0 0.0
  %101 = vmatprep.subr.mxu0 0.0
  %102 = vmatpush1.msra.mxu0 0.0
  %103 = vmatprep.subr.mxu0 0.0
  %104 = vmatpush1.msra.mxu0 0.0
  %105 = vmatprep.subr.mxu0 0.0
  %106 = vmatpush1.msra.mxu0 0.0
  %107 = vmatprep.subr.mxu0 0.0
  %v108 = vand.u32 %v33, 4294901760
  %109 = vmatpush1.msra.mxu0 %v108
  %110 = vmatprep.subr.mxu0 0.0
  %v111 = vand.u32 %v32, 4294901760
  %112 = vmatpush1.msra.mxu0 %v111
  %113 = vmatprep.subr.mxu0 0.0
  %v114 = vand.u32 %v31, 4294901760
  %115 = vmatpush1.msra.mxu0 %v114
  %116 = vmatprep.subr.mxu0 0.0
  %v117 = vand.u32 %v30, 4294901760
  %118 = vmatpush1.msra.mxu0 %v117
  %119 = vmatprep.subr.mxu0 0.0
  %120 = vmatpush2.msra.mxu0 0.0
  %121 = vmatprep.subr.mxu0 0.0
  %122 = vmatpush2.msra.mxu0 0.0
  %123 = vmatprep.subr.mxu0 0.0
  %124 = vmatpush2.msra.mxu0 0.0
  %125 = vmatprep.subr.mxu0 0.0
  %126 = vmatpush2.msra.mxu0 0.0
  %127 = vmatprep.subr.mxu0 0.0
  %128 = vmatpush2.msra.mxu0 0.0
  %129 = vmatprep.subr.mxu0 0.0
  %130 = vmatpush2.msra.mxu0 0.0
  %131 = vmatprep.subr.mxu0 0.0
  %132 = vmatpush2.msra.mxu0 0.0
  %133 = vmatprep.subr.mxu0 0.0
  %134 = vmatpush2.msra.mxu0 0.0
  %135 = vmatprep.subr.mxu0 0.0
  %136 = vmatpush2.msra.mxu0 0.0
  %137 = vmatprep.subr.mxu0 0.0
  %138 = vmatpush2.msra.mxu0 0.0
  %139 = vmatprep.subr.mxu0 0.0
  %140 = vmatpush2.msra.mxu0 0.0
  %141 = vmatprep.subr.mxu0 0.0
  %142 = vmatpush2.msra.mxu0 0.0
  %143 = vmatprep.subr.mxu0 0.0
  %144 = vmatpush2.msra.mxu0 0.0
  %145 = vmatprep.subr.mxu0 0.0
  %146 = vmatpush2.msra.mxu0 0.0
  %147 = vmatprep.subr.mxu0 0.0
  %148 = vmatpush2.msra.mxu0 0.0
  %149 = vmatprep.subr.mxu0 0.0
  %150 = vmatpush2.msra.mxu0 0.0
  %151 = vmatprep.mubr.f32.mxu0 0.0
  %v152 = vand.u32 %v36, 4294901760
  %v153 = vsub.f32 %v36, %v152
  %v154 = vand.u32 %v153, 4294901760
  %v155 = vsub.f32 %v153, %v154
  %v156 = vand.u32 %v155, 4294901760
  %157 = vmatmul.mubr.f32.gmra.mxu0 %v156
  %v158 = vpop.f32.mrf.mxu0
  %v159 = vadd.f32 0.0, %v158
  %v160 = vpop.f32.mrf.mxu0
  %161 = vmatprep.mubr.f32.mxu0 0.0
  %v162 = vand.u32 %v39, 4294901760
  %v163 = vsub.f32 %v39, %v162
  %v164 = vand.u32 %v163, 4294901760
  %v165 = vsub.f32 %v163, %v164
  %v166 = vand.u32 %v165, 4294901760
  %167 = vmatmul.mubr.f32.gmra.mxu0 %v166
  %v168 = vpop.f32.mrf.mxu0
  %v169 = vadd.f32 0.0, %v168
  %v170 = vpop.f32.mrf.mxu0
  %171 = vmatprep.mubr.f32.mxu0 0.0
  %v172 = vand.u32 %v42, 4294901760
  %v173 = vsub.f32 %v42, %v172
  %v174 = vand.u32 %v173, 4294901760
  %v175 = vsub.f32 %v173, %v174
  %v176 = vand.u32 %v175, 4294901760
  %177 = vmatmul.mubr.f32.gmra.mxu0 %v176
  %v178 = vpop.f32.mrf.mxu0
  %v179 = vadd.f32 0.0, %v178
  %v180 = vpop.f32.mrf.mxu0
  %181 = vmatprep.mubr.f32.mxu0 0.0
  %v182 = vand.u32 %v45, 4294901760
  %v183 = vsub.f32 %v45, %v182
  %v184 = vand.u32 %v183, 4294901760
  %v185 = vsub.f32 %v183, %v184
  %v186 = vand.u32 %v185, 4294901760
  %187 = vmatmul.mubr.f32.gmra.mxu0 %v186
  %v188 = vpop.f32.mrf.mxu0
  %v189 = vadd.f32 0.0, %v188
  %v190 = vpop.f32.mrf.mxu0
  %191 = vmatprep.mubr.f32.mxu0 0.0
  %v192 = vand.u32 %v48, 4294901760
  %v193 = vsub.f32 %v48, %v192
  %v194 = vand.u32 %v193, 4294901760
  %v195 = vsub.f32 %v193, %v194
  %v196 = vand.u32 %v195, 4294901760
  %197 = vmatmul.mubr.f32.gmra.mxu0 %v196
  %v198 = vpop.f32.mrf.mxu0
  %v199 = vadd.f32 0.0, %v198
  %v200 = vpop.f32.mrf.mxu0
  %201 = vmatprep.mubr.f32.mxu0 0.0
  %v202 = vand.u32 %v51, 4294901760
  %v203 = vsub.f32 %v51, %v202
  %v204 = vand.u32 %v203, 4294901760
  %v205 = vsub.f32 %v203, %v204
  %v206 = vand.u32 %v205, 4294901760
  %207 = vmatmul.mubr.f32.gmra.mxu0 %v206
  %v208 = vpop.f32.mrf.mxu0
  %v209 = vadd.f32 0.0, %v208
  %v210 = vpop.f32.mrf.mxu0
  %211 = vmatprep.mubr.f32.mxu0 0.0
  %v212 = vand.u32 %v54, 4294901760
  %v213 = vsub.f32 %v54, %v212
  %v214 = vand.u32 %v213, 4294901760
  %v215 = vsub.f32 %v213, %v214
  %v216 = vand.u32 %v215, 4294901760
  %217 = vmatmul.mubr.f32.gmra.mxu0 %v216
  %v218 = vpop.f32.mrf.mxu0
  %v219 = vadd.f32 0.0, %v218
  %v220 = vpop.f32.mrf.mxu0
  %221 = vmatprep.mubr.f32.mxu0 0.0
  %v222 = vand.u32 %v57, 4294901760
  %v223 = vsub.f32 %v57, %v222
  %v224 = vand.u32 %v223, 4294901760
  %v225 = vsub.f32 %v223, %v224
  %v226 = vand.u32 %v225, 4294901760
  %227 = vmatmul.mubr.f32.gmra.mxu0 %v226
  %v228 = vpop.f32.mrf.mxu0
  %v229 = vadd.f32 0.0, %v228
  %v230 = vpop.f32.mrf.mxu0
  %231 = vmatprep.mubr.f32.mxu0 0.0
  %v232 = vand.u32 %v60, 4294901760
  %v233 = vsub.f32 %v60, %v232
  %v234 = vand.u32 %v233, 4294901760
  %v235 = vsub.f32 %v233, %v234
  %v236 = vand.u32 %v235, 4294901760
  %237 = vmatmul.mubr.f32.gmra.mxu0 %v236
  %v238 = vpop.f32.mrf.mxu0
  %v239 = vadd.f32 0.0, %v238
  %v240 = vpop.f32.mrf.mxu0
  %241 = vmatprep.mubr.f32.mxu0 0.0
  %v242 = vand.u32 %v63, 4294901760
  %v243 = vsub.f32 %v63, %v242
  %v244 = vand.u32 %v243, 4294901760
  %v245 = vsub.f32 %v243, %v244
  %v246 = vand.u32 %v245, 4294901760
  %247 = vmatmul.mubr.f32.gmra.mxu0 %v246
  %v248 = vpop.f32.mrf.mxu0
  %v249 = vadd.f32 0.0, %v248
  %v250 = vpop.f32.mrf.mxu0
  %251 = vmatprep.mubr.f32.mxu0 0.0
  %v252 = vand.u32 %v66, 4294901760
  %v253 = vsub.f32 %v66, %v252
  %v254 = vand.u32 %v253, 4294901760
  %v255 = vsub.f32 %v253, %v254
  %v256 = vand.u32 %v255, 4294901760
  %257 = vmatmul.mubr.f32.gmra.mxu0 %v256
  %v258 = vpop.f32.mrf.mxu0
  %v259 = vadd.f32 0.0, %v258
  %v260 = vpop.f32.mrf.mxu0
  %261 = vmatprep.mubr.f32.mxu0 0.0
  %v262 = vand.u32 %v69, 4294901760
  %v263 = vsub.f32 %v69, %v262
  %v264 = vand.u32 %v263, 4294901760
  %v265 = vsub.f32 %v263, %v264
  %v266 = vand.u32 %v265, 4294901760
  %267 = vmatmul.mubr.f32.gmra.mxu0 %v266
  %v268 = vpop.f32.mrf.mxu0
  %v269 = vadd.f32 0.0, %v268
  %v270 = vpop.f32.mrf.mxu0
  %271 = vmatprep.mubr.f32.mxu0 0.0
  %v272 = vand.u32 %v72, 4294901760
  %v273 = vsub.f32 %v72, %v272
  %v274 = vand.u32 %v273, 4294901760
  %v275 = vsub.f32 %v273, %v274
  %v276 = vand.u32 %v275, 4294901760
  %277 = vmatmul.mubr.f32.gmra.mxu0 %v276
  %v278 = vpop.f32.mrf.mxu0
  %v279 = vadd.f32 0.0, %v278
  %v280 = vpop.f32.mrf.mxu0
  %281 = vmatprep.mubr.f32.mxu0 0.0
  %v282 = vand.u32 %v75, 4294901760
  %v283 = vsub.f32 %v75, %v282
  %v284 = vand.u32 %v283, 4294901760
  %v285 = vsub.f32 %v283, %v284
  %v286 = vand.u32 %v285, 4294901760
  %287 = vmatmul.mubr.f32.gmra.mxu0 %v286
  %v288 = vpop.f32.mrf.mxu0
  %v289 = vadd.f32 0.0, %v288
  %v290 = vpop.f32.mrf.mxu0
  %291 = vmatprep.mubr.f32.mxu0 0.0
  %v292 = vand.u32 %v78, 4294901760
  %v293 = vsub.f32 %v78, %v292
  %v294 = vand.u32 %v293, 4294901760
  %v295 = vsub.f32 %v293, %v294
  %v296 = vand.u32 %v295, 4294901760
  %297 = vmatmul.mubr.f32.gmra.mxu0 %v296
  %v298 = vpop.f32.mrf.mxu0
  %v299 = vadd.f32 0.0, %v298
  %v300 = vpop.f32.mrf.mxu0
  %301 = vmatprep.mubr.f32.mxu0 0.0
  %v302 = vand.u32 %v81, 4294901760
  %v303 = vsub.f32 %v81, %v302
  %v304 = vand.u32 %v303, 4294901760
  %v305 = vsub.f32 %v303, %v304
  %v306 = vand.u32 %v305, 4294901760
  %307 = vmatmul.mubr.f32.gmra.mxu0 %v306
  %v308 = vpop.f32.mrf.mxu0
  %v309 = vadd.f32 0.0, %v308
  %v310 = vpop.f32.mrf.mxu0
  %311 = vdwg.mxu0
  %312 = vmatprep.subr.mxu0 0.0
  %313 = vmatpush1.msra.mxu0 0.0
  %314 = vmatprep.subr.mxu0 0.0
  %315 = vmatpush1.msra.mxu0 0.0
  %316 = vmatprep.subr.mxu0 0.0
  %317 = vmatpush1.msra.mxu0 0.0
  %318 = vmatprep.subr.mxu0 0.0
  %319 = vmatpush1.msra.mxu0 0.0
  %320 = vmatprep.subr.mxu0 0.0
  %321 = vmatpush1.msra.mxu0 0.0
  %322 = vmatprep.subr.mxu0 0.0
  %323 = vmatpush1.msra.mxu0 0.0
  %324 = vmatprep.subr.mxu0 0.0
  %325 = vmatpush1.msra.mxu0 0.0
  %326 = vmatprep.subr.mxu0 0.0
  %327 = vmatpush1.msra.mxu0 0.0
  %328 = vmatprep.subr.mxu0 0.0
  %329 = vmatpush1.msra.mxu0 0.0
  %330 = vmatprep.subr.mxu0 0.0
  %331 = vmatpush1.msra.mxu0 0.0
  %332 = vmatprep.subr.mxu0 0.0
  %333 = vmatpush1.msra.mxu0 0.0
  %334 = vmatprep.subr.mxu0 0.0
  %335 = vmatpush1.msra.mxu0 0.0
  %336 = vmatprep.subr.mxu0 0.0
  %v337 = vand.u32 %v33, 4294901760
  %v338 = vsub.f32 %v33, %v337
  %v339 = vand.u32 %v338, 4294901760
  %v340 = vsub.f32 %v338, %v339
  %v341 = vand.u32 %v340, 4294901760
  %342 = vmatpush1.msra.mxu0 %v341
  %343 = vmatprep.subr.mxu0 0.0
  %v344 = vand.u32 %v32, 4294901760
  %v345 = vsub.f32 %v32, %v344
  %v346 = vand.u32 %v345, 4294901760
  %v347 = vsub.f32 %v345, %v346
  %v348 = vand.u32 %v347, 4294901760
  %349 = vmatpush1.msra.mxu0 %v348
  %350 = vmatprep.subr.mxu0 0.0
  %v351 = vand.u32 %v31, 4294901760
  %v352 = vsub.f32 %v31, %v351
  %v353 = vand.u32 %v352, 4294901760
  %v354 = vsub.f32 %v352, %v353
  %v355 = vand.u32 %v354, 4294901760
  %356 = vmatpush1.msra.mxu0 %v355
  %357 = vmatprep.subr.mxu0 0.0
  %v358 = vand.u32 %v30, 4294901760
  %v359 = vsub.f32 %v30, %v358
  %v360 = vand.u32 %v359, 4294901760
  %v361 = vsub.f32 %v359, %v360
  %v362 = vand.u32 %v361, 4294901760
  %363 = vmatpush1.msra.mxu0 %v362
  %364 = vmatprep.subr.mxu0 0.0
  %365 = vmatpush2.msra.mxu0 0.0
  %366 = vmatprep.subr.mxu0 0.0
  %367 = vmatpush2.msra.mxu0 0.0
  %368 = vmatprep.subr.mxu0 0.0
  %369 = vmatpush2.msra.mxu0 0.0
  %370 = vmatprep.subr.mxu0 0.0
  %371 = vmatpush2.msra.mxu0 0.0
  %372 = vmatprep.subr.mxu0 0.0
  %373 = vmatpush2.msra.mxu0 0.0
  %374 = vmatprep.subr.mxu0 0.0
  %375 = vmatpush2.msra.mxu0 0.0
  %376 = vmatprep.subr.mxu0 0.0
  %377 = vmatpush2.msra.mxu0 0.0
  %378 = vmatprep.subr.mxu0 0.0
  %379 = vmatpush2.msra.mxu0 0.0
  %380 = vmatprep.subr.mxu0 0.0
  %381 = vmatpush2.msra.mxu0 0.0
  %382 = vmatprep.subr.mxu0 0.0
  %383 = vmatpush2.msra.mxu0 0.0
  %384 = vmatprep.subr.mxu0 0.0
  %385 = vmatpush2.msra.mxu0 0.0
  %386 = vmatprep.subr.mxu0 0.0
  %387 = vmatpush2.msra.mxu0 0.0
  %388 = vmatprep.subr.mxu0 0.0
  %389 = vmatpush2.msra.mxu0 0.0
  %390 = vmatprep.subr.mxu0 0.0
  %391 = vmatpush2.msra.mxu0 0.0
  %392 = vmatprep.subr.mxu0 0.0
  %393 = vmatpush2.msra.mxu0 0.0
  %394 = vmatprep.subr.mxu0 0.0
  %395 = vmatpush2.msra.mxu0 0.0
  %396 = vmatprep.mubr.f32.mxu0 0.0
  %v397 = vand.u32 %v36, 4294901760
  %398 = vmatmul.mubr.f32.gmra.mxu0 %v397
  %v399 = vpop.f32.mrf.mxu0
  %v400 = vadd.f32 %v159, %v399
  %v401 = vpop.f32.mrf.mxu0
  %402 = vmatprep.mubr.f32.mxu0 0.0
  %v403 = vand.u32 %v39, 4294901760
  %404 = vmatmul.mubr.f32.gmra.mxu0 %v403
  %v405 = vpop.f32.mrf.mxu0
  %v406 = vadd.f32 %v169, %v405
  %v407 = vpop.f32.mrf.mxu0
  %408 = vmatprep.mubr.f32.mxu0 0.0
  %v409 = vand.u32 %v42, 4294901760
  %410 = vmatmul.mubr.f32.gmra.mxu0 %v409
  %v411 = vpop.f32.mrf.mxu0
  %v412 = vadd.f32 %v179, %v411
  %v413 = vpop.f32.mrf.mxu0
  %414 = vmatprep.mubr.f32.mxu0 0.0
  %v415 = vand.u32 %v45, 4294901760
  %416 = vmatmul.mubr.f32.gmra.mxu0 %v415
  %v417 = vpop.f32.mrf.mxu0
  %v418 = vadd.f32 %v189, %v417
  %v419 = vpop.f32.mrf.mxu0
  %420 = vmatprep.mubr.f32.mxu0 0.0
  %v421 = vand.u32 %v48, 4294901760
  %422 = vmatmul.mubr.f32.gmra.mxu0 %v421
  %v423 = vpop.f32.mrf.mxu0
  %v424 = vadd.f32 %v199, %v423
  %v425 = vpop.f32.mrf.mxu0
  %426 = vmatprep.mubr.f32.mxu0 0.0
  %v427 = vand.u32 %v51, 4294901760
  %428 = vmatmul.mubr.f32.gmra.mxu0 %v427
  %v429 = vpop.f32.mrf.mxu0
  %v430 = vadd.f32 %v209, %v429
  %v431 = vpop.f32.mrf.mxu0
  %432 = vmatprep.mubr.f32.mxu0 0.0
  %v433 = vand.u32 %v54, 4294901760
  %434 = vmatmul.mubr.f32.gmra.mxu0 %v433
  %v435 = vpop.f32.mrf.mxu0
  %v436 = vadd.f32 %v219, %v435
  %v437 = vpop.f32.mrf.mxu0
  %438 = vmatprep.mubr.f32.mxu0 0.0
  %v439 = vand.u32 %v57, 4294901760
  %440 = vmatmul.mubr.f32.gmra.mxu0 %v439
  %v441 = vpop.f32.mrf.mxu0
  %v442 = vadd.f32 %v229, %v441
  %v443 = vpop.f32.mrf.mxu0
  %444 = vmatprep.mubr.f32.mxu0 0.0
  %v445 = vand.u32 %v60, 4294901760
  %446 = vmatmul.mubr.f32.gmra.mxu0 %v445
  %v447 = vpop.f32.mrf.mxu0
  %v448 = vadd.f32 %v239, %v447
  %v449 = vpop.f32.mrf.mxu0
  %450 = vmatprep.mubr.f32.mxu0 0.0
  %v451 = vand.u32 %v63, 4294901760
  %452 = vmatmul.mubr.f32.gmra.mxu0 %v451
  %v453 = vpop.f32.mrf.mxu0
  %v454 = vadd.f32 %v249, %v453
  %v455 = vpop.f32.mrf.mxu0
  %456 = vmatprep.mubr.f32.mxu0 0.0
  %v457 = vand.u32 %v66, 4294901760
  %458 = vmatmul.mubr.f32.gmra.mxu0 %v457
  %v459 = vpop.f32.mrf.mxu0
  %v460 = vadd.f32 %v259, %v459
  %v461 = vpop.f32.mrf.mxu0
  %462 = vmatprep.mubr.f32.mxu0 0.0
  %v463 = vand.u32 %v69, 4294901760
  %464 = vmatmul.mubr.f32.gmra.mxu0 %v463
  %v465 = vpop.f32.mrf.mxu0
  %v466 = vadd.f32 %v269, %v465
  %v467 = vpop.f32.mrf.mxu0
  %468 = vmatprep.mubr.f32.mxu0 0.0
  %v469 = vand.u32 %v72, 4294901760
  %470 = vmatmul.mubr.f32.gmra.mxu0 %v469
  %v471 = vpop.f32.mrf.mxu0
  %v472 = vadd.f32 %v279, %v471
  %v473 = vpop.f32.mrf.mxu0
  %474 = vmatprep.mubr.f32.mxu0 0.0
  %v475 = vand.u32 %v75, 4294901760
  %476 = vmatmul.mubr.f32.gmra.mxu0 %v475
  %v477 = vpop.f32.mrf.mxu0
  %v478 = vadd.f32 %v289, %v477
  %v479 = vpop.f32.mrf.mxu0
  %480 = vmatprep.mubr.f32.mxu0 0.0
  %v481 = vand.u32 %v78, 4294901760
  %482 = vmatmul.mubr.f32.gmra.mxu0 %v481
  %v483 = vpop.f32.mrf.mxu0
  %v484 = vadd.f32 %v299, %v483
  %v485 = vpop.f32.mrf.mxu0
  %486 = vmatprep.mubr.f32.mxu0 0.0
  %v487 = vand.u32 %v81, 4294901760
  %488 = vmatmul.mubr.f32.gmra.mxu0 %v487
  %v489 = vpop.f32.mrf.mxu0
  %v490 = vadd.f32 %v309, %v489
  %v491 = vpop.f32.mrf.mxu0
  %492 = vdwg.mxu0
  %493 = vmatprep.subr.mxu0 0.0
  %494 = vmatpush1.msra.mxu0 0.0
  %495 = vmatprep.subr.mxu0 0.0
  %496 = vmatpush1.msra.mxu0 0.0
  %497 = vmatprep.subr.mxu0 0.0
  %498 = vmatpush1.msra.mxu0 0.0
  %499 = vmatprep.subr.mxu0 0.0
  %500 = vmatpush1.msra.mxu0 0.0
  %501 = vmatprep.subr.mxu0 0.0
  %502 = vmatpush1.msra.mxu0 0.0
  %503 = vmatprep.subr.mxu0 0.0
  %504 = vmatpush1.msra.mxu0 0.0
  %505 = vmatprep.subr.mxu0 0.0
  %506 = vmatpush1.msra.mxu0 0.0
  %507 = vmatprep.subr.mxu0 0.0
  %508 = vmatpush1.msra.mxu0 0.0
  %509 = vmatprep.subr.mxu0 0.0
  %510 = vmatpush1.msra.mxu0 0.0
  %511 = vmatprep.subr.mxu0 0.0
  %512 = vmatpush1.msra.mxu0 0.0
  %513 = vmatprep.subr.mxu0 0.0
  %514 = vmatpush1.msra.mxu0 0.0
  %515 = vmatprep.subr.mxu0 0.0
  %516 = vmatpush1.msra.mxu0 0.0
  %517 = vmatprep.subr.mxu0 0.0
  %v518 = vand.u32 %v33, 4294901760
  %v519 = vsub.f32 %v33, %v518
  %520 = vmatpush1.msra.mxu0 %v519
  %521 = vmatprep.subr.mxu0 0.0
  %v522 = vand.u32 %v32, 4294901760
  %v523 = vsub.f32 %v32, %v522
  %524 = vmatpush1.msra.mxu0 %v523
  %525 = vmatprep.subr.mxu0 0.0
  %v526 = vand.u32 %v31, 4294901760
  %v527 = vsub.f32 %v31, %v526
  %528 = vmatpush1.msra.mxu0 %v527
  %529 = vmatprep.subr.mxu0 0.0
  %v530 = vand.u32 %v30, 4294901760
  %v531 = vsub.f32 %v30, %v530
  %532 = vmatpush1.msra.mxu0 %v531
  %533 = vmatprep.subr.mxu0 0.0
  %534 = vmatpush2.msra.mxu0 0.0
  %535 = vmatprep.subr.mxu0 0.0
  %536 = vmatpush2.msra.mxu0 0.0
  %537 = vmatprep.subr.mxu0 0.0
  %538 = vmatpush2.msra.mxu0 0.0
  %539 = vmatprep.subr.mxu0 0.0
  %540 = vmatpush2.msra.mxu0 0.0
  %541 = vmatprep.subr.mxu0 0.0
  %542 = vmatpush2.msra.mxu0 0.0
  %543 = vmatprep.subr.mxu0 0.0
  %544 = vmatpush2.msra.mxu0 0.0
  %545 = vmatprep.subr.mxu0 0.0
  %546 = vmatpush2.msra.mxu0 0.0
  %547 = vmatprep.subr.mxu0 0.0
  %548 = vmatpush2.msra.mxu0 0.0
  %549 = vmatprep.subr.mxu0 0.0
  %550 = vmatpush2.msra.mxu0 0.0
  %551 = vmatprep.subr.mxu0 0.0
  %552 = vmatpush2.msra.mxu0 0.0
  %553 = vmatprep.subr.mxu0 0.0
  %554 = vmatpush2.msra.mxu0 0.0
  %555 = vmatprep.subr.mxu0 0.0
  %556 = vmatpush2.msra.mxu0 0.0
  %557 = vmatprep.subr.mxu0 0.0
  %558 = vmatpush2.msra.mxu0 0.0
  %559 = vmatprep.subr.mxu0 0.0
  %560 = vmatpush2.msra.mxu0 0.0
  %561 = vmatprep.subr.mxu0 0.0
  %562 = vmatpush2.msra.mxu0 0.0
  %563 = vmatprep.subr.mxu0 0.0
  %564 = vmatpush2.msra.mxu0 0.0
  %565 = vmatprep.mubr.f32.mxu0 0.0
  %v566 = vand.u32 %v36, 4294901760
  %v567 = vsub.f32 %v36, %v566
  %568 = vmatmul.mubr.f32.gmra.mxu0 %v567
  %v569 = vpop.f32.mrf.mxu0
  %v570 = vadd.f32 %v400, %v569
  %v571 = vpop.f32.mrf.mxu0
  %572 = vmatprep.mubr.f32.mxu0 0.0
  %v573 = vand.u32 %v39, 4294901760
  %v574 = vsub.f32 %v39, %v573
  %575 = vmatmul.mubr.f32.gmra.mxu0 %v574
  %v576 = vpop.f32.mrf.mxu0
  %v577 = vadd.f32 %v406, %v576
  %v578 = vpop.f32.mrf.mxu0
  %579 = vmatprep.mubr.f32.mxu0 0.0
  %v580 = vand.u32 %v42, 4294901760
  %v581 = vsub.f32 %v42, %v580
  %582 = vmatmul.mubr.f32.gmra.mxu0 %v581
  %v583 = vpop.f32.mrf.mxu0
  %v584 = vadd.f32 %v412, %v583
  %v585 = vpop.f32.mrf.mxu0
  %586 = vmatprep.mubr.f32.mxu0 0.0
  %v587 = vand.u32 %v45, 4294901760
  %v588 = vsub.f32 %v45, %v587
  %589 = vmatmul.mubr.f32.gmra.mxu0 %v588
  %v590 = vpop.f32.mrf.mxu0
  %v591 = vadd.f32 %v418, %v590
  %v592 = vpop.f32.mrf.mxu0
  %593 = vmatprep.mubr.f32.mxu0 0.0
  %v594 = vand.u32 %v48, 4294901760
  %v595 = vsub.f32 %v48, %v594
  %596 = vmatmul.mubr.f32.gmra.mxu0 %v595
  %v597 = vpop.f32.mrf.mxu0
  %v598 = vadd.f32 %v424, %v597
  %v599 = vpop.f32.mrf.mxu0
  %600 = vmatprep.mubr.f32.mxu0 0.0
  %v601 = vand.u32 %v51, 4294901760
  %v602 = vsub.f32 %v51, %v601
  %603 = vmatmul.mubr.f32.gmra.mxu0 %v602
  %v604 = vpop.f32.mrf.mxu0
  %v605 = vadd.f32 %v430, %v604
  %v606 = vpop.f32.mrf.mxu0
  %607 = vmatprep.mubr.f32.mxu0 0.0
  %v608 = vand.u32 %v54, 4294901760
  %v609 = vsub.f32 %v54, %v608
  %610 = vmatmul.mubr.f32.gmra.mxu0 %v609
  %v611 = vpop.f32.mrf.mxu0
  %v612 = vadd.f32 %v436, %v611
  %v613 = vpop.f32.mrf.mxu0
  %614 = vmatprep.mubr.f32.mxu0 0.0
  %v615 = vand.u32 %v57, 4294901760
  %v616 = vsub.f32 %v57, %v615
  %617 = vmatmul.mubr.f32.gmra.mxu0 %v616
  %v618 = vpop.f32.mrf.mxu0
  %v619 = vadd.f32 %v442, %v618
  %v620 = vpop.f32.mrf.mxu0
  %621 = vmatprep.mubr.f32.mxu0 0.0
  %v622 = vand.u32 %v60, 4294901760
  %v623 = vsub.f32 %v60, %v622
  %624 = vmatmul.mubr.f32.gmra.mxu0 %v623
  %v625 = vpop.f32.mrf.mxu0
  %v626 = vadd.f32 %v448, %v625
  %v627 = vpop.f32.mrf.mxu0
  %628 = vmatprep.mubr.f32.mxu0 0.0
  %v629 = vand.u32 %v63, 4294901760
  %v630 = vsub.f32 %v63, %v629
  %631 = vmatmul.mubr.f32.gmra.mxu0 %v630
  %v632 = vpop.f32.mrf.mxu0
  %v633 = vadd.f32 %v454, %v632
  %v634 = vpop.f32.mrf.mxu0
  %635 = vmatprep.mubr.f32.mxu0 0.0
  %v636 = vand.u32 %v66, 4294901760
  %v637 = vsub.f32 %v66, %v636
  %638 = vmatmul.mubr.f32.gmra.mxu0 %v637
  %v639 = vpop.f32.mrf.mxu0
  %v640 = vadd.f32 %v460, %v639
  %v641 = vpop.f32.mrf.mxu0
  %642 = vmatprep.mubr.f32.mxu0 0.0
  %v643 = vand.u32 %v69, 4294901760
  %v644 = vsub.f32 %v69, %v643
  %645 = vmatmul.mubr.f32.gmra.mxu0 %v644
  %v646 = vpop.f32.mrf.mxu0
  %v647 = vadd.f32 %v466, %v646
  %v648 = vpop.f32.mrf.mxu0
  %649 = vmatprep.mubr.f32.mxu0 0.0
  %v650 = vand.u32 %v72, 4294901760
  %v651 = vsub.f32 %v72, %v650
  %652 = vmatmul.mubr.f32.gmra.mxu0 %v651
  %v653 = vpop.f32.mrf.mxu0
  %v654 = vadd.f32 %v472, %v653
  %v655 = vpop.f32.mrf.mxu0
  %656 = vmatprep.mubr.f32.mxu0 0.0
  %v657 = vand.u32 %v75, 4294901760
  %v658 = vsub.f32 %v75, %v657
  %659 = vmatmul.mubr.f32.gmra.mxu0 %v658
  %v660 = vpop.f32.mrf.mxu0
  %v661 = vadd.f32 %v478, %v660
  %v662 = vpop.f32.mrf.mxu0
  %663 = vmatprep.mubr.f32.mxu0 0.0
  %v664 = vand.u32 %v78, 4294901760
  %v665 = vsub.f32 %v78, %v664
  %666 = vmatmul.mubr.f32.gmra.mxu0 %v665
  %v667 = vpop.f32.mrf.mxu0
  %v668 = vadd.f32 %v484, %v667
  %v669 = vpop.f32.mrf.mxu0
  %670 = vmatprep.mubr.f32.mxu0 0.0
  %v671 = vand.u32 %v81, 4294901760
  %v672 = vsub.f32 %v81, %v671
  %673 = vmatmul.mubr.f32.gmra.mxu0 %v672
  %v674 = vpop.f32.mrf.mxu0
  %v675 = vadd.f32 %v490, %v674
  %v676 = vpop.f32.mrf.mxu0
  %677 = vdwg.mxu0
  %678 = vmatprep.subr.mxu0 0.0
  %679 = vmatpush1.msra.mxu0 0.0
  %680 = vmatprep.subr.mxu0 0.0
  %681 = vmatpush1.msra.mxu0 0.0
  %682 = vmatprep.subr.mxu0 0.0
  %683 = vmatpush1.msra.mxu0 0.0
  %684 = vmatprep.subr.mxu0 0.0
  %685 = vmatpush1.msra.mxu0 0.0
  %686 = vmatprep.subr.mxu0 0.0
  %687 = vmatpush1.msra.mxu0 0.0
  %688 = vmatprep.subr.mxu0 0.0
  %689 = vmatpush1.msra.mxu0 0.0
  %690 = vmatprep.subr.mxu0 0.0
  %691 = vmatpush1.msra.mxu0 0.0
  %692 = vmatprep.subr.mxu0 0.0
  %693 = vmatpush1.msra.mxu0 0.0
  %694 = vmatprep.subr.mxu0 0.0
  %695 = vmatpush1.msra.mxu0 0.0
  %696 = vmatprep.subr.mxu0 0.0
  %697 = vmatpush1.msra.mxu0 0.0
  %698 = vmatprep.subr.mxu0 0.0
  %699 = vmatpush1.msra.mxu0 0.0
  %700 = vmatprep.subr.mxu0 0.0
  %701 = vmatpush1.msra.mxu0 0.0
  %702 = vmatprep.subr.mxu0 0.0
  %v703 = vand.u32 %v33, 4294901760
  %704 = vmatpush1.msra.mxu0 %v703
  %705 = vmatprep.subr.mxu0 0.0
  %v706 = vand.u32 %v32, 4294901760
  %707 = vmatpush1.msra.mxu0 %v706
  %708 = vmatprep.subr.mxu0 0.0
  %v709 = vand.u32 %v31, 4294901760
  %710 = vmatpush1.msra.mxu0 %v709
  %711 = vmatprep.subr.mxu0 0.0
  %v712 = vand.u32 %v30, 4294901760
  %713 = vmatpush1.msra.mxu0 %v712
  %714 = vmatprep.subr.mxu0 0.0
  %715 = vmatpush2.msra.mxu0 0.0
  %716 = vmatprep.subr.mxu0 0.0
  %717 = vmatpush2.msra.mxu0 0.0
  %718 = vmatprep.subr.mxu0 0.0
  %719 = vmatpush2.msra.mxu0 0.0
  %720 = vmatprep.subr.mxu0 0.0
  %721 = vmatpush2.msra.mxu0 0.0
  %722 = vmatprep.subr.mxu0 0.0
  %723 = vmatpush2.msra.mxu0 0.0
  %724 = vmatprep.subr.mxu0 0.0
  %725 = vmatpush2.msra.mxu0 0.0
  %726 = vmatprep.subr.mxu0 0.0
  %727 = vmatpush2.msra.mxu0 0.0
  %728 = vmatprep.subr.mxu0 0.0
  %729 = vmatpush2.msra.mxu0 0.0
  %730 = vmatprep.subr.mxu0 0.0
  %731 = vmatpush2.msra.mxu0 0.0
  %732 = vmatprep.subr.mxu0 0.0
  %733 = vmatpush2.msra.mxu0 0.0
  %734 = vmatprep.subr.mxu0 0.0
  %735 = vmatpush2.msra.mxu0 0.0
  %736 = vmatprep.subr.mxu0 0.0
  %737 = vmatpush2.msra.mxu0 0.0
  %738 = vmatprep.subr.mxu0 0.0
  %739 = vmatpush2.msra.mxu0 0.0
  %740 = vmatprep.subr.mxu0 0.0
  %741 = vmatpush2.msra.mxu0 0.0
  %742 = vmatprep.subr.mxu0 0.0
  %743 = vmatpush2.msra.mxu0 0.0
  %744 = vmatprep.subr.mxu0 0.0
  %745 = vmatpush2.msra.mxu0 0.0
  %746 = vmatprep.mubr.f32.mxu0 0.0
  %v747 = vand.u32 %v36, 4294901760
  %v748 = vsub.f32 %v36, %v747
  %v749 = vand.u32 %v748, 4294901760
  %750 = vmatmul.mubr.f32.gmra.mxu0 %v749
  %v751 = vpop.f32.mrf.mxu0
  %v752 = vadd.f32 %v570, %v751
  %v753 = vpop.f32.mrf.mxu0
  %754 = vmatprep.mubr.f32.mxu0 0.0
  %v755 = vand.u32 %v39, 4294901760
  %v756 = vsub.f32 %v39, %v755
  %v757 = vand.u32 %v756, 4294901760
  %758 = vmatmul.mubr.f32.gmra.mxu0 %v757
  %v759 = vpop.f32.mrf.mxu0
  %v760 = vadd.f32 %v577, %v759
  %v761 = vpop.f32.mrf.mxu0
  %762 = vmatprep.mubr.f32.mxu0 0.0
  %v763 = vand.u32 %v42, 4294901760
  %v764 = vsub.f32 %v42, %v763
  %v765 = vand.u32 %v764, 4294901760
  %766 = vmatmul.mubr.f32.gmra.mxu0 %v765
  %v767 = vpop.f32.mrf.mxu0
  %v768 = vadd.f32 %v584, %v767
  %v769 = vpop.f32.mrf.mxu0
  %770 = vmatprep.mubr.f32.mxu0 0.0
  %v771 = vand.u32 %v45, 4294901760
  %v772 = vsub.f32 %v45, %v771
  %v773 = vand.u32 %v772, 4294901760
  %774 = vmatmul.mubr.f32.gmra.mxu0 %v773
  %v775 = vpop.f32.mrf.mxu0
  %v776 = vadd.f32 %v591, %v775
  %v777 = vpop.f32.mrf.mxu0
  %778 = vmatprep.mubr.f32.mxu0 0.0
  %v779 = vand.u32 %v48, 4294901760
  %v780 = vsub.f32 %v48, %v779
  %v781 = vand.u32 %v780, 4294901760
  %782 = vmatmul.mubr.f32.gmra.mxu0 %v781
  %v783 = vpop.f32.mrf.mxu0
  %v784 = vadd.f32 %v598, %v783
  %v785 = vpop.f32.mrf.mxu0
  %786 = vmatprep.mubr.f32.mxu0 0.0
  %v787 = vand.u32 %v51, 4294901760
  %v788 = vsub.f32 %v51, %v787
  %v789 = vand.u32 %v788, 4294901760
  %790 = vmatmul.mubr.f32.gmra.mxu0 %v789
  %v791 = vpop.f32.mrf.mxu0
  %v792 = vadd.f32 %v605, %v791
  %v793 = vpop.f32.mrf.mxu0
  %794 = vmatprep.mubr.f32.mxu0 0.0
  %v795 = vand.u32 %v54, 4294901760
  %v796 = vsub.f32 %v54, %v795
  %v797 = vand.u32 %v796, 4294901760
  %798 = vmatmul.mubr.f32.gmra.mxu0 %v797
  %v799 = vpop.f32.mrf.mxu0
  %v800 = vadd.f32 %v612, %v799
  %v801 = vpop.f32.mrf.mxu0
  %802 = vmatprep.mubr.f32.mxu0 0.0
  %v803 = vand.u32 %v57, 4294901760
  %v804 = vsub.f32 %v57, %v803
  %v805 = vand.u32 %v804, 4294901760
  %806 = vmatmul.mubr.f32.gmra.mxu0 %v805
  %v807 = vpop.f32.mrf.mxu0
  %v808 = vadd.f32 %v619, %v807
  %v809 = vpop.f32.mrf.mxu0
  %810 = vmatprep.mubr.f32.mxu0 0.0
  %v811 = vand.u32 %v60, 4294901760
  %v812 = vsub.f32 %v60, %v811
  %v813 = vand.u32 %v812, 4294901760
  %814 = vmatmul.mubr.f32.gmra.mxu0 %v813
  %v815 = vpop.f32.mrf.mxu0
  %v816 = vadd.f32 %v626, %v815
  %v817 = vpop.f32.mrf.mxu0
  %818 = vmatprep.mubr.f32.mxu0 0.0
  %v819 = vand.u32 %v63, 4294901760
  %v820 = vsub.f32 %v63, %v819
  %v821 = vand.u32 %v820, 4294901760
  %822 = vmatmul.mubr.f32.gmra.mxu0 %v821
  %v823 = vpop.f32.mrf.mxu0
  %v824 = vadd.f32 %v633, %v823
  %v825 = vpop.f32.mrf.mxu0
  %826 = vmatprep.mubr.f32.mxu0 0.0
  %v827 = vand.u32 %v66, 4294901760
  %v828 = vsub.f32 %v66, %v827
  %v829 = vand.u32 %v828, 4294901760
  %830 = vmatmul.mubr.f32.gmra.mxu0 %v829
  %v831 = vpop.f32.mrf.mxu0
  %v832 = vadd.f32 %v640, %v831
  %v833 = vpop.f32.mrf.mxu0
  %834 = vmatprep.mubr.f32.mxu0 0.0
  %v835 = vand.u32 %v69, 4294901760
  %v836 = vsub.f32 %v69, %v835
  %v837 = vand.u32 %v836, 4294901760
  %838 = vmatmul.mubr.f32.gmra.mxu0 %v837
  %v839 = vpop.f32.mrf.mxu0
  %v840 = vadd.f32 %v647, %v839
  %v841 = vpop.f32.mrf.mxu0
  %842 = vmatprep.mubr.f32.mxu0 0.0
  %v843 = vand.u32 %v72, 4294901760
  %v844 = vsub.f32 %v72, %v843
  %v845 = vand.u32 %v844, 4294901760
  %846 = vmatmul.mubr.f32.gmra.mxu0 %v845
  %v847 = vpop.f32.mrf.mxu0
  %v848 = vadd.f32 %v654, %v847
  %v849 = vpop.f32.mrf.mxu0
  %850 = vmatprep.mubr.f32.mxu0 0.0
  %v851 = vand.u32 %v75, 4294901760
  %v852 = vsub.f32 %v75, %v851
  %v853 = vand.u32 %v852, 4294901760
  %854 = vmatmul.mubr.f32.gmra.mxu0 %v853
  %v855 = vpop.f32.mrf.mxu0
  %v856 = vadd.f32 %v661, %v855
  %v857 = vpop.f32.mrf.mxu0
  %858 = vmatprep.mubr.f32.mxu0 0.0
  %v859 = vand.u32 %v78, 4294901760
  %v860 = vsub.f32 %v78, %v859
  %v861 = vand.u32 %v860, 4294901760
  %862 = vmatmul.mubr.f32.gmra.mxu0 %v861
  %v863 = vpop.f32.mrf.mxu0
  %v864 = vadd.f32 %v668, %v863
  %v865 = vpop.f32.mrf.mxu0
  %866 = vmatprep.mubr.f32.mxu0 0.0
  %v867 = vand.u32 %v81, 4294901760
  %v868 = vsub.f32 %v81, %v867
  %v869 = vand.u32 %v868, 4294901760
  %870 = vmatmul.mubr.f32.gmra.mxu0 %v869
  %v871 = vpop.f32.mrf.mxu0
  %v872 = vadd.f32 %v675, %v871
  %v873 = vpop.f32.mrf.mxu0
  %874 = vdwg.mxu0
  %875 = vmatprep.subr.mxu0 0.0
  %876 = vmatpush1.msra.mxu0 0.0
  %877 = vmatprep.subr.mxu0 0.0
  %878 = vmatpush1.msra.mxu0 0.0
  %879 = vmatprep.subr.mxu0 0.0
  %880 = vmatpush1.msra.mxu0 0.0
  %881 = vmatprep.subr.mxu0 0.0
  %882 = vmatpush1.msra.mxu0 0.0
  %883 = vmatprep.subr.mxu0 0.0
  %884 = vmatpush1.msra.mxu0 0.0
  %885 = vmatprep.subr.mxu0 0.0
  %886 = vmatpush1.msra.mxu0 0.0
  %887 = vmatprep.subr.mxu0 0.0
  %888 = vmatpush1.msra.mxu0 0.0
  %889 = vmatprep.subr.mxu0 0.0
  %890 = vmatpush1.msra.mxu0 0.0
  %891 = vmatprep.subr.mxu0 0.0
  %892 = vmatpush1.msra.mxu0 0.0
  %893 = vmatprep.subr.mxu0 0.0
  %894 = vmatpush1.msra.mxu0 0.0
  %895 = vmatprep.subr.mxu0 0.0
  %896 = vmatpush1.msra.mxu0 0.0
  %897 = vmatprep.subr.mxu0 0.0
  %898 = vmatpush1.msra.mxu0 0.0
  %899 = vmatprep.subr.mxu0 0.0
  %v900 = vand.u32 %v33, 4294901760
  %v901 = vsub.f32 %v33, %v900
  %v902 = vand.u32 %v901, 4294901760
  %903 = vmatpush1.msra.mxu0 %v902
  %904 = vmatprep.subr.mxu0 0.0
  %v905 = vand.u32 %v32, 4294901760
  %v906 = vsub.f32 %v32, %v905
  %v907 = vand.u32 %v906, 4294901760
  %908 = vmatpush1.msra.mxu0 %v907
  %909 = vmatprep.subr.mxu0 0.0
  %v910 = vand.u32 %v31, 4294901760
  %v911 = vsub.f32 %v31, %v910
  %v912 = vand.u32 %v911, 4294901760
  %913 = vmatpush1.msra.mxu0 %v912
  %914 = vmatprep.subr.mxu0 0.0
  %v915 = vand.u32 %v30, 4294901760
  %v916 = vsub.f32 %v30, %v915
  %v917 = vand.u32 %v916, 4294901760
  %918 = vmatpush1.msra.mxu0 %v917
  %919 = vmatprep.subr.mxu0 0.0
  %920 = vmatpush2.msra.mxu0 0.0
  %921 = vmatprep.subr.mxu0 0.0
  %922 = vmatpush2.msra.mxu0 0.0
  %923 = vmatprep.subr.mxu0 0.0
  %924 = vmatpush2.msra.mxu0 0.0
  %925 = vmatprep.subr.mxu0 0.0
  %926 = vmatpush2.msra.mxu0 0.0
  %927 = vmatprep.subr.mxu0 0.0
  %928 = vmatpush2.msra.mxu0 0.0
  %929 = vmatprep.subr.mxu0 0.0
  %930 = vmatpush2.msra.mxu0 0.0
  %931 = vmatprep.subr.mxu0 0.0
  %932 = vmatpush2.msra.mxu0 0.0
  %933 = vmatprep.subr.mxu0 0.0
  %934 = vmatpush2.msra.mxu0 0.0
  %935 = vmatprep.subr.mxu0 0.0
  %936 = vmatpush2.msra.mxu0 0.0
  %937 = vmatprep.subr.mxu0 0.0
  %938 = vmatpush2.msra.mxu0 0.0
  %939 = vmatprep.subr.mxu0 0.0
  %940 = vmatpush2.msra.mxu0 0.0
  %941 = vmatprep.subr.mxu0 0.0
  %942 = vmatpush2.msra.mxu0 0.0
  %943 = vmatprep.subr.mxu0 0.0
  %944 = vmatpush2.msra.mxu0 0.0
  %945 = vmatprep.subr.mxu0 0.0
  %946 = vmatpush2.msra.mxu0 0.0
  %947 = vmatprep.subr.mxu0 0.0
  %948 = vmatpush2.msra.mxu0 0.0
  %949 = vmatprep.subr.mxu0 0.0
  %950 = vmatpush2.msra.mxu0 0.0
  %951 = vmatprep.mubr.f32.mxu0 0.0
  %v952 = vand.u32 %v36, 4294901760
  %953 = vmatmul.mubr.f32.gmra.mxu0 %v952
  %v954 = vpop.f32.mrf.mxu0
  %v955 = vadd.f32 %v752, %v954
  %v956 = vpop.f32.mrf.mxu0
  %957 = vmatprep.mubr.f32.mxu0 0.0
  %v958 = vand.u32 %v39, 4294901760
  %959 = vmatmul.mubr.f32.gmra.mxu0 %v958
  %v960 = vpop.f32.mrf.mxu0
  %v961 = vadd.f32 %v760, %v960
  %v962 = vpop.f32.mrf.mxu0
  %963 = vmatprep.mubr.f32.mxu0 0.0
  %v964 = vand.u32 %v42, 4294901760
  %965 = vmatmul.mubr.f32.gmra.mxu0 %v964
  %v966 = vpop.f32.mrf.mxu0
  %v967 = vadd.f32 %v768, %v966
  %v968 = vpop.f32.mrf.mxu0
  %969 = vmatprep.mubr.f32.mxu0 0.0
  %v970 = vand.u32 %v45, 4294901760
  %971 = vmatmul.mubr.f32.gmra.mxu0 %v970
  %v972 = vpop.f32.mrf.mxu0
  %v973 = vadd.f32 %v776, %v972
  %v974 = vpop.f32.mrf.mxu0
  %975 = vmatprep.mubr.f32.mxu0 0.0
  %v976 = vand.u32 %v48, 4294901760
  %977 = vmatmul.mubr.f32.gmra.mxu0 %v976
  %v978 = vpop.f32.mrf.mxu0
  %v979 = vadd.f32 %v784, %v978
  %v980 = vpop.f32.mrf.mxu0
  %981 = vmatprep.mubr.f32.mxu0 0.0
  %v982 = vand.u32 %v51, 4294901760
  %983 = vmatmul.mubr.f32.gmra.mxu0 %v982
  %v984 = vpop.f32.mrf.mxu0
  %v985 = vadd.f32 %v792, %v984
  %v986 = vpop.f32.mrf.mxu0
  %987 = vmatprep.mubr.f32.mxu0 0.0
  %v988 = vand.u32 %v54, 4294901760
  %989 = vmatmul.mubr.f32.gmra.mxu0 %v988
  %v990 = vpop.f32.mrf.mxu0
  %v991 = vadd.f32 %v800, %v990
  %v992 = vpop.f32.mrf.mxu0
  %993 = vmatprep.mubr.f32.mxu0 0.0
  %v994 = vand.u32 %v57, 4294901760
  %995 = vmatmul.mubr.f32.gmra.mxu0 %v994
  %v996 = vpop.f32.mrf.mxu0
  %v997 = vadd.f32 %v808, %v996
  %v998 = vpop.f32.mrf.mxu0
  %999 = vmatprep.mubr.f32.mxu0 0.0
  %v1000 = vand.u32 %v60, 4294901760
  %1001 = vmatmul.mubr.f32.gmra.mxu0 %v1000
  %v1002 = vpop.f32.mrf.mxu0
  %v1003 = vadd.f32 %v816, %v1002
  %v1004 = vpop.f32.mrf.mxu0
  %1005 = vmatprep.mubr.f32.mxu0 0.0
  %v1006 = vand.u32 %v63, 4294901760
  %1007 = vmatmul.mubr.f32.gmra.mxu0 %v1006
  %v1008 = vpop.f32.mrf.mxu0
  %v1009 = vadd.f32 %v824, %v1008
  %v1010 = vpop.f32.mrf.mxu0
  %1011 = vmatprep.mubr.f32.mxu0 0.0
  %v1012 = vand.u32 %v66, 4294901760
  %1013 = vmatmul.mubr.f32.gmra.mxu0 %v1012
  %v1014 = vpop.f32.mrf.mxu0
  %v1015 = vadd.f32 %v832, %v1014
  %v1016 = vpop.f32.mrf.mxu0
  %1017 = vmatprep.mubr.f32.mxu0 0.0
  %v1018 = vand.u32 %v69, 4294901760
  %1019 = vmatmul.mubr.f32.gmra.mxu0 %v1018
  %v1020 = vpop.f32.mrf.mxu0
  %v1021 = vadd.f32 %v840, %v1020
  %v1022 = vpop.f32.mrf.mxu0
  %1023 = vmatprep.mubr.f32.mxu0 0.0
  %v1024 = vand.u32 %v72, 4294901760
  %1025 = vmatmul.mubr.f32.gmra.mxu0 %v1024
  %v1026 = vpop.f32.mrf.mxu0
  %v1027 = vadd.f32 %v848, %v1026
  %v1028 = vpop.f32.mrf.mxu0
  %1029 = vmatprep.mubr.f32.mxu0 0.0
  %v1030 = vand.u32 %v75, 4294901760
  %1031 = vmatmul.mubr.f32.gmra.mxu0 %v1030
  %v1032 = vpop.f32.mrf.mxu0
  %v1033 = vadd.f32 %v856, %v1032
  %v1034 = vpop.f32.mrf.mxu0
  %1035 = vmatprep.mubr.f32.mxu0 0.0
  %v1036 = vand.u32 %v78, 4294901760
  %1037 = vmatmul.mubr.f32.gmra.mxu0 %v1036
  %v1038 = vpop.f32.mrf.mxu0
  %v1039 = vadd.f32 %v864, %v1038
  %v1040 = vpop.f32.mrf.mxu0
  %1041 = vmatprep.mubr.f32.mxu0 0.0
  %v1042 = vand.u32 %v81, 4294901760
  %1043 = vmatmul.mubr.f32.gmra.mxu0 %v1042
  %v1044 = vpop.f32.mrf.mxu0
  %v1045 = vadd.f32 %v872, %v1044
  %v1046 = vpop.f32.mrf.mxu0
  %1047 = vdwg.mxu0
  %1048 = vmatprep.subr.mxu0 0.0
  %1049 = vmatpush1.msra.mxu0 0.0
  %1050 = vmatprep.subr.mxu0 0.0
  %1051 = vmatpush1.msra.mxu0 0.0
  %1052 = vmatprep.subr.mxu0 0.0
  %1053 = vmatpush1.msra.mxu0 0.0
  %1054 = vmatprep.subr.mxu0 0.0
  %1055 = vmatpush1.msra.mxu0 0.0
  %1056 = vmatprep.subr.mxu0 0.0
  %1057 = vmatpush1.msra.mxu0 0.0
  %1058 = vmatprep.subr.mxu0 0.0
  %1059 = vmatpush1.msra.mxu0 0.0
  %1060 = vmatprep.subr.mxu0 0.0
  %1061 = vmatpush1.msra.mxu0 0.0
  %1062 = vmatprep.subr.mxu0 0.0
  %1063 = vmatpush1.msra.mxu0 0.0
  %1064 = vmatprep.subr.mxu0 0.0
  %1065 = vmatpush1.msra.mxu0 0.0
  %1066 = vmatprep.subr.mxu0 0.0
  %1067 = vmatpush1.msra.mxu0 0.0
  %1068 = vmatprep.subr.mxu0 0.0
  %1069 = vmatpush1.msra.mxu0 0.0
  %1070 = vmatprep.subr.mxu0 0.0
  %1071 = vmatpush1.msra.mxu0 0.0
  %1072 = vmatprep.subr.mxu0 0.0
  %v1073 = vand.u32 %v33, 4294901760
  %1074 = vmatpush1.msra.mxu0 %v1073
  %1075 = vmatprep.subr.mxu0 0.0
  %v1076 = vand.u32 %v32, 4294901760
  %1077 = vmatpush1.msra.mxu0 %v1076
  %1078 = vmatprep.subr.mxu0 0.0
  %v1079 = vand.u32 %v31, 4294901760
  %1080 = vmatpush1.msra.mxu0 %v1079
  %1081 = vmatprep.subr.mxu0 0.0
  %v1082 = vand.u32 %v30, 4294901760
  %1083 = vmatpush1.msra.mxu0 %v1082
  %1084 = vmatprep.subr.mxu0 0.0
  %1085 = vmatpush2.msra.mxu0 0.0
  %1086 = vmatprep.subr.mxu0 0.0
  %1087 = vmatpush2.msra.mxu0 0.0
  %1088 = vmatprep.subr.mxu0 0.0
  %1089 = vmatpush2.msra.mxu0 0.0
  %1090 = vmatprep.subr.mxu0 0.0
  %1091 = vmatpush2.msra.mxu0 0.0
  %1092 = vmatprep.subr.mxu0 0.0
  %1093 = vmatpush2.msra.mxu0 0.0
  %1094 = vmatprep.subr.mxu0 0.0
  %1095 = vmatpush2.msra.mxu0 0.0
  %1096 = vmatprep.subr.mxu0 0.0
  %1097 = vmatpush2.msra.mxu0 0.0
  %1098 = vmatprep.subr.mxu0 0.0
  %1099 = vmatpush2.msra.mxu0 0.0
  %1100 = vmatprep.subr.mxu0 0.0
  %1101 = vmatpush2.msra.mxu0 0.0
  %1102 = vmatprep.subr.mxu0 0.0
  %1103 = vmatpush2.msra.mxu0 0.0
  %1104 = vmatprep.subr.mxu0 0.0
  %1105 = vmatpush2.msra.mxu0 0.0
  %1106 = vmatprep.subr.mxu0 0.0
  %1107 = vmatpush2.msra.mxu0 0.0
  %1108 = vmatprep.subr.mxu0 0.0
  %1109 = vmatpush2.msra.mxu0 0.0
  %1110 = vmatprep.subr.mxu0 0.0
  %1111 = vmatpush2.msra.mxu0 0.0
  %1112 = vmatprep.subr.mxu0 0.0
  %1113 = vmatpush2.msra.mxu0 0.0
  %1114 = vmatprep.subr.mxu0 0.0
  %1115 = vmatpush2.msra.mxu0 0.0
  %1116 = vmatprep.mubr.f32.mxu0 0.0
  %v1117 = vand.u32 %v36, 4294901760
  %1118 = vmatmul.mubr.f32.gmra.mxu0 %v1117
  %v1119 = vpop.f32.mrf.mxu0
  %v1120 = vadd.f32 %v955, %v1119
  %v1121 = vpop.f32.mrf.mxu0
  %1122 = vmatprep.mubr.f32.mxu0 0.0
  %v1123 = vand.u32 %v39, 4294901760
  %1124 = vmatmul.mubr.f32.gmra.mxu0 %v1123
  %v1125 = vpop.f32.mrf.mxu0
  %v1126 = vadd.f32 %v961, %v1125
  %v1127 = vpop.f32.mrf.mxu0
  %1128 = vmatprep.mubr.f32.mxu0 0.0
  %v1129 = vand.u32 %v42, 4294901760
  %1130 = vmatmul.mubr.f32.gmra.mxu0 %v1129
  %v1131 = vpop.f32.mrf.mxu0
  %v1132 = vadd.f32 %v967, %v1131
  %v1133 = vpop.f32.mrf.mxu0
  %1134 = vmatprep.mubr.f32.mxu0 0.0
  %v1135 = vand.u32 %v45, 4294901760
  %1136 = vmatmul.mubr.f32.gmra.mxu0 %v1135
  %v1137 = vpop.f32.mrf.mxu0
  %v1138 = vadd.f32 %v973, %v1137
  %v1139 = vpop.f32.mrf.mxu0
  %1140 = vmatprep.mubr.f32.mxu0 0.0
  %v1141 = vand.u32 %v48, 4294901760
  %1142 = vmatmul.mubr.f32.gmra.mxu0 %v1141
  %v1143 = vpop.f32.mrf.mxu0
  %v1144 = vadd.f32 %v979, %v1143
  %v1145 = vpop.f32.mrf.mxu0
  %1146 = vmatprep.mubr.f32.mxu0 0.0
  %v1147 = vand.u32 %v51, 4294901760
  %1148 = vmatmul.mubr.f32.gmra.mxu0 %v1147
  %v1149 = vpop.f32.mrf.mxu0
  %v1150 = vadd.f32 %v985, %v1149
  %v1151 = vpop.f32.mrf.mxu0
  %1152 = vmatprep.mubr.f32.mxu0 0.0
  %v1153 = vand.u32 %v54, 4294901760
  %1154 = vmatmul.mubr.f32.gmra.mxu0 %v1153
  %v1155 = vpop.f32.mrf.mxu0
  %v1156 = vadd.f32 %v991, %v1155
  %v1157 = vpop.f32.mrf.mxu0
  %1158 = vmatprep.mubr.f32.mxu0 0.0
  %v1159 = vand.u32 %v57, 4294901760
  %1160 = vmatmul.mubr.f32.gmra.mxu0 %v1159
  %v1161 = vpop.f32.mrf.mxu0
  %v1162 = vadd.f32 %v997, %v1161
  %v1163 = vpop.f32.mrf.mxu0
  %1164 = vmatprep.mubr.f32.mxu0 0.0
  %v1165 = vand.u32 %v60, 4294901760
  %1166 = vmatmul.mubr.f32.gmra.mxu0 %v1165
  %v1167 = vpop.f32.mrf.mxu0
  %v1168 = vadd.f32 %v1003, %v1167
  %v1169 = vpop.f32.mrf.mxu0
  %1170 = vmatprep.mubr.f32.mxu0 0.0
  %v1171 = vand.u32 %v63, 4294901760
  %1172 = vmatmul.mubr.f32.gmra.mxu0 %v1171
  %v1173 = vpop.f32.mrf.mxu0
  %v1174 = vadd.f32 %v1009, %v1173
  %v1175 = vpop.f32.mrf.mxu0
  %1176 = vmatprep.mubr.f32.mxu0 0.0
  %v1177 = vand.u32 %v66, 4294901760
  %1178 = vmatmul.mubr.f32.gmra.mxu0 %v1177
  %v1179 = vpop.f32.mrf.mxu0
  %v1180 = vadd.f32 %v1015, %v1179
  %v1181 = vpop.f32.mrf.mxu0
  %1182 = vmatprep.mubr.f32.mxu0 0.0
  %v1183 = vand.u32 %v69, 4294901760
  %1184 = vmatmul.mubr.f32.gmra.mxu0 %v1183
  %v1185 = vpop.f32.mrf.mxu0
  %v1186 = vadd.f32 %v1021, %v1185
  %v1187 = vpop.f32.mrf.mxu0
  %1188 = vmatprep.mubr.f32.mxu0 0.0
  %v1189 = vand.u32 %v72, 4294901760
  %1190 = vmatmul.mubr.f32.gmra.mxu0 %v1189
  %v1191 = vpop.f32.mrf.mxu0
  %v1192 = vadd.f32 %v1027, %v1191
  %v1193 = vpop.f32.mrf.mxu0
  %1194 = vmatprep.mubr.f32.mxu0 0.0
  %v1195 = vand.u32 %v75, 4294901760
  %1196 = vmatmul.mubr.f32.gmra.mxu0 %v1195
  %v1197 = vpop.f32.mrf.mxu0
  %v1198 = vadd.f32 %v1033, %v1197
  %v1199 = vpop.f32.mrf.mxu0
  %1200 = vmatprep.mubr.f32.mxu0 0.0
  %v1201 = vand.u32 %v78, 4294901760
  %1202 = vmatmul.mubr.f32.gmra.mxu0 %v1201
  %v1203 = vpop.f32.mrf.mxu0
  %v1204 = vadd.f32 %v1039, %v1203
  %v1205 = vpop.f32.mrf.mxu0
  %1206 = vmatprep.mubr.f32.mxu0 0.0
  %v1207 = vand.u32 %v81, 4294901760
  %1208 = vmatmul.mubr.f32.gmra.mxu0 %v1207
  %v1209 = vpop.f32.mrf.mxu0
  %v1210 = vadd.f32 %v1045, %v1209
  %v1211 = vpop.f32.mrf.mxu0
  %1212 = vdwg.mxu0
  %v1213 = vmax.f32 %v1120, %v1168
  %v1214 = vmax.f32 %v1126, %v1174
  %v1215 = vmax.f32 %v1132, %v1180
  %v1216 = vmax.f32 %v1138, %v1186
  %v1217 = vmax.f32 %v1144, %v1192
  %v1218 = vmax.f32 %v1150, %v1198
  %v1219 = vmax.f32 %v1156, %v1204
  %v1220 = vmax.f32 %v1162, %v1210
  %v1221 = vmax.f32 %v1213, %v1217
  %v1222 = vmax.f32 %v1214, %v1218
  %v1223 = vmax.f32 %v1215, %v1219
  %v1224 = vmax.f32 %v1216, %v1220
  %v1225 = vmax.f32 %v1221, %v1223
  %v1226 = vmax.f32 %v1222, %v1224
  %v1227 = vmax.f32 %v1225, %v1226
  %v1228 = vld [vmem:[%s2] sm:$0xff]
  %v1229 = vadd.f32 %v1227, %v1228
  %1230 = vst [vmem:[%s3] sm:$0xff] %v1229
  // Predicated region
  $region14: #{maxpool_module_forward.1} parent=0 // pred_check
    _
  $region15: #{maxpool_module_forward.1} parent=0 // pred_check_branch
    %1232 = sbr.rel (0) target = $region17
  $region16: #{maxpool_module_forward.1} parent=0 // pred_region
    _
  $region17: #{maxpool_module_forward.1} parent=0 // pred_fallthru
    _
  // Predicated region
  $region18: #{maxpool_module_forward.1} parent=0 // pred_check
    _
  $region19: #{maxpool_module_forward.1} parent=0 // pred_check_branch
    %1234 = sbr.rel (0) target = $region21
  $region20: #{maxpool_module_forward.1} parent=0 // pred_region
    _
  $region21: #{maxpool_module_forward.1} parent=0 // pred_fallthru
    _

</llo_original>
